<compile_context>
chip_gen: v7x
topology: tpu7x:2x2x1
jax: 0.10.0
libtpu: 0.0.40
codegen_flags: <defaults>
</compile_context>

<pallas_src>
import jax
import jax.numpy as jnp
from jax.experimental import pallas as pl
from jax.experimental.pallas import tpu as pltpu

LANES = 128


def _apelu_kernel(alpha_ref, beta_ref, x_ref, o_ref):
    # alpha_ref / beta_ref: (1, 1) f32 scalars in SMEM
    # x_ref / o_ref: (row_tile, LANES) tiles in VMEM (f32 or bf16 I/O)
    a = alpha_ref[0, 0]
    b = beta_ref[0, 0]
    # Compute in f32 (works on all generations incl. v5e); cast back on store.
    x = x_ref[...].astype(jnp.float32)
    out = jnp.where(x >= 0, x, a * x * jnp.exp(b * x))
    out = out.astype(o_ref.dtype)
    # torch.nan_to_num defaults: nan -> 0, +/-inf -> dtype max/min (of the
    # output dtype, matching torch on the tensor's dtype).
    o_ref[...] = jnp.nan_to_num(out)


def _choose_row_tile(rows: int, sublane_mult: int, itemsize: int) -> int:
    """Pick a row tile: ~1 MiB per block, multiple of the sublane tile."""
    target_rows = (1 << 20) // (LANES * itemsize)  # 2048 for f32, 4096 for bf16
    if rows < sublane_mult:
        # Tiny input: full-dim block (escape hatch for the (8,128) rule).
        return rows
    row_tile = min(target_rows, (rows // sublane_mult) * sublane_mult)
    # Keep a handful of grid steps so v7x's two TensorCores both get work
    # (the "parallel" axis is sharded across cores).
    while pl.cdiv(rows, row_tile) < 4 and row_tile >= 2 * sublane_mult:
        row_tile = max(sublane_mult, (row_tile // 2 // sublane_mult) * sublane_mult)
    return row_tile


def apelu(x: jax.Array, alpha: jax.Array, beta: jax.Array) -> jax.Array:
    """Elementwise APELU. x may be any shape (e.g. NCHW); f32 or bf16."""
    orig_shape = x.shape
    orig_dtype = x.dtype

    # Keep bf16/f32 HBM I/O as-is (bf16 halves bytes on a mem-bound kernel);
    # anything else round-trips through f32.
    if orig_dtype == jnp.float32 or orig_dtype == jnp.bfloat16:
        io_dtype = orig_dtype
    else:
        io_dtype = jnp.float32
    xf = x.astype(io_dtype).reshape(-1)
    n = xf.shape[0]

    # Pad only to the next multiple of LANES; no copy at all when already
    # lane-aligned.  Partial row-tiles are handled by the grid, not padding.
    rem = n % LANES
    if rem:
        xf = jnp.concatenate([xf, jnp.zeros((LANES - rem,), io_dtype)])
    rows = xf.shape[0] // LANES
    x2d = xf.reshape(rows, LANES)

    sublane_mult = 16 if io_dtype == jnp.bfloat16 else 8
    itemsize = jnp.dtype(io_dtype).itemsize
    row_tile = _choose_row_tile(rows, sublane_mult, itemsize)
    grid = (pl.cdiv(rows, row_tile),)

    # VMEM budget: in + out, double-buffered, plus headroom; cap at 32 MiB so
    # it is safe on v7x (64 MiB physical) as well as v5e/v6e.
    tile_bytes = row_tile * LANES * itemsize
    vmem_limit = int(min(max(4 * tile_bytes + (4 << 20), 16 << 20), 32 << 20))

    alpha_s = jnp.asarray(alpha, jnp.float32).reshape(1, 1)
    beta_s = jnp.asarray(beta, jnp.float32).reshape(1, 1)

    out2d = pl.pallas_call(
        _apelu_kernel,
        out_shape=jax.ShapeDtypeStruct((rows, LANES), io_dtype),
        grid=grid,
        in_specs=[
            pl.BlockSpec(memory_space=pltpu.SMEM),   # alpha
            pl.BlockSpec(memory_space=pltpu.SMEM),   # beta
            pl.BlockSpec((row_tile, LANES), lambda i: (i, 0)),
        ],
        out_specs=pl.BlockSpec((row_tile, LANES), lambda i: (i, 0)),
        compiler_params=pltpu.CompilerParams(
            dimension_semantics=("parallel",),
            vmem_limit_bytes=vmem_limit,
        ),
    )(alpha_s, beta_s, x2d)

    out = out2d.reshape(-1)
    if rem:
        out = out[:n]
    return out.reshape(orig_shape).astype(orig_dtype)


def apelu_reference(x, alpha, beta):
    out = jnp.where(x >= 0, x, alpha * x * jnp.exp(beta * x))
    return jnp.nan_to_num(out)


if __name__ == "__main__":
    key = jax.random.PRNGKey(0)
    # NCHW input, same convention as the PyTorch module's typical usage.
    x = jax.random.normal(key, (2, 4, 16, 16), dtype=jnp.float32) * 3.0

    # Deterministic parameter init matching APELU.__init__ defaults.
    alpha = jnp.float32(0.01)
    beta = jnp.float32(1.0)

    out = jax.block_until_ready(apelu(x, alpha, beta))

    ref = apelu_reference(x, alpha, beta)
    assert out.shape == x.shape and out.dtype == x.dtype
    assert jnp.allclose(out, ref, atol=1e-6, rtol=1e-6)

    print("KERNEL_OK")
</pallas_src>

<mosaic_0001>
module attributes {stable_mosaic.version = 11 : i64} {
  func.func @_apelu_kernel(%arg0: i32, %arg1: memref<1x1xf32, #tpu.memory_space<smem>>, %arg2: memref<1x1xf32, #tpu.memory_space<smem>>, %arg3: memref<8x128xf32, #tpu.memory_space<vmem>>, %arg4: memref<8x128xf32, #tpu.memory_space<vmem>>) attributes {dimension_semantics = [#tpu.dimension_semantics<parallel>], iteration_bounds = array<i64: 2>, scalar_prefetch = 0 : i64, scratch_operands = 0 : i64, tpu.core_type = #tpu.core_type<tc>, window_params = [{transform_indices = @transform_0, window_bounds = array<i64: 1, 1>}, {transform_indices = @transform_1, window_bounds = array<i64: 1, 1>}, {transform_indices = @transform_2, window_bounds = array<i64: 8, 128>}, {transform_indices = @transform_3, window_bounds = array<i64: 8, 128>}]} {
    %c0 = arith.constant 0 : index
    %c0_0 = arith.constant 0 : index
    %0 = memref.load %arg1[%c0, %c0_0] : memref<1x1xf32, #tpu.memory_space<smem>>
    %c0_1 = arith.constant 0 : index
    %c0_2 = arith.constant 0 : index
    %1 = memref.load %arg2[%c0_1, %c0_2] : memref<1x1xf32, #tpu.memory_space<smem>>
    %c0_3 = arith.constant 0 : index
    %c0_4 = arith.constant 0 : index
    %2 = vector.load %arg3[%c0_3, %c0_4] : memref<8x128xf32, #tpu.memory_space<vmem>>, vector<8x128xf32>
    %cst = arith.constant 0.000000e+00 : f32
    %3 = vector.broadcast %cst : f32 to vector<8x128xf32>
    %4 = arith.cmpf oge, %2, %3 : vector<8x128xf32>
    %5 = vector.broadcast %0 : f32 to vector<8x128xf32>
    %6 = arith.mulf %5, %2 : vector<8x128xf32>
    %7 = vector.broadcast %1 : f32 to vector<8x128xf32>
    %8 = arith.mulf %7, %2 : vector<8x128xf32>
    %9 = math.exp %8 : vector<8x128xf32>
    %10 = arith.mulf %6, %9 : vector<8x128xf32>
    %11 = arith.select %4, %2, %10 : vector<8x128xi1>, vector<8x128xf32>
    %12 = arith.cmpf one, %11, %11 : vector<8x128xf32>
    %cst_5 = arith.constant 0.000000e+00 : f32
    %13 = vector.broadcast %cst_5 : f32 to vector<8x128xf32>
    %14 = arith.select %12, %13, %11 : vector<8x128xi1>, vector<8x128xf32>
    %cst_6 = arith.constant 0x7F800000 : f32
    %15 = vector.broadcast %cst_6 : f32 to vector<8x128xf32>
    %16 = arith.cmpf oeq, %14, %15 : vector<8x128xf32>
    %cst_7 = arith.constant 3.40282347E+38 : f32
    %17 = vector.broadcast %cst_7 : f32 to vector<8x128xf32>
    %18 = arith.select %16, %17, %14 : vector<8x128xi1>, vector<8x128xf32>
    %cst_8 = arith.constant 0xFF800000 : f32
    %19 = vector.broadcast %cst_8 : f32 to vector<8x128xf32>
    %20 = arith.cmpf oeq, %18, %19 : vector<8x128xf32>
    %cst_9 = arith.constant -3.40282347E+38 : f32
    %21 = vector.broadcast %cst_9 : f32 to vector<8x128xf32>
    %22 = arith.select %20, %21, %18 : vector<8x128xi1>, vector<8x128xf32>
    %c0_10 = arith.constant 0 : index
    %c0_11 = arith.constant 0 : index
    %23 = vector.load %arg4[%c0_10, %c0_11] : memref<8x128xf32, #tpu.memory_space<vmem>>, vector<8x128xf32>
    tpu.vector_store %arg4[%c0_10, %c0_11], %22 {strides = array<i32>} : memref<8x128xf32, #tpu.memory_space<vmem>>, vector<8x128xf32>,
    return
  }
  func.func @transform_0(%arg0: i32) -> (i32, i32) {
    %c0_i32 = arith.constant 0 : i32
    %c0_i32_0 = arith.constant 0 : i32
    %c0_i32_1 = arith.constant 0 : i32
    return %c0_i32, %c0_i32_0 : i32, i32
  }
  func.func @transform_1(%arg0: i32) -> (i32, i32) {
    %c0_i32 = arith.constant 0 : i32
    %c0_i32_0 = arith.constant 0 : i32
    %c0_i32_1 = arith.constant 0 : i32
    return %c0_i32, %c0_i32_0 : i32, i32
  }
  func.func @transform_2(%arg0: i32) -> (i32, i32) {
    %c0_i32 = arith.constant 0 : i32
    %c0_i32_0 = arith.constant 0 : i32
    return %arg0, %c0_i32 : i32, i32
  }
  func.func @transform_3(%arg0: i32) -> (i32, i32) {
    %c0_i32 = arith.constant 0 : i32
    %c0_i32_0 = arith.constant 0 : i32
    return %arg0, %c0_i32 : i32, i32
  }
}

</mosaic_0001>

<llo_original>
// kernel: tpu_custom_call.1
$region0: #{tpu_custom_call.1}
  #allocation0 [shape = 'u32[]', space=smem, size = 0x4, offset = 0x4, fixed_abs, tag = 'smem constant byte address 0x4 - core index']
  #allocation1 [shape = 'u32[144,128]{1,0:T(1,128)}', space=vmem, size = 0x12000, scoped, tag = 'internal scratch']
  #allocation2 [shape = 'f32[1,1]{1,0:T(1,128)S(6)}', space=smem, size = 0x200, scoped, tag = 'scoped memory for tpu_custom_call.1']
  #allocation3 [shape = 'f32[1,1]{1,0:T(1,128)S(6)}', space=smem, size = 0x200, scoped, tag = 'scoped memory for tpu_custom_call.1']
  %s0 = inlined_call_operand.<no memory space> [shape: f32[1,1], index: 0, kind: input, shape index: {}]
  %s1 = inlined_call_operand.<no memory space> [shape: f32[1,1], index: 1, kind: input, shape index: {}]
  %s2 = inlined_call_operand.hbm [shape: f32[16,128], index: 2, kind: input, shape index: {}]
  %s3 = inlined_call_operand.hbm [shape: f32[16,128], index: 3, kind: output, shape index: {}]
  %s4 = sld [smem:[#allocation0]]
  $region49: #{tpu_custom_call.1} parent=0
    _
  %s6 = ssub.s32 1, %s4
  %s7 = scalar_select 0, %s6, %s4
  %8 = sst [smem:[#allocation2]] %s0
  %9 = sst [smem:[#allocation3]] %s1
  $region1: #{tpu_custom_call.1} parent=0
    #allocation4 [shape = 'u8[8192]{0}', space=vmem, size = 0x2000, scoped, tag = 'input window, operand 2']
    #allocation5 [shape = 's32[2]{0}', space=sflag, size = 0x8, scoped, tag = 'scoped memory for tpu_custom_call.1']
    #allocation6 [shape = 's32[2]{0}', space=sflag, size = 0x8, scoped, tag = 'scoped memory for tpu_custom_call.1']
    #allocation7 [shape = 'u8[8192]{0}', space=vmem, size = 0x2000, scoped, tag = 'output window, operand 0']
    %10 = vsyncpa [#allocation5], 0
    %s11 = scalar_lea.sflag [#allocation5], 1
    %12 = vsyncpa %s11, 0
    %13 = vsyncpa [#allocation6], 0
    %s14 = scalar_lea.sflag [#allocation6], 1
    %15 = vsyncpa %s14, 0
    loop: start=0, step=1, limit=4
    $region2: #{tpu_custom_call.1} parent=1 // loop_pre_header
      _
    $region3: #{tpu_custom_call.1} parent=1 // loop_header
      %s17 = sphi 0, %s21
      %p18 = scmp.ge.s32.totalorder %s17, 4
      %s25 = sphi 0, %s25
      %s27 = sphi 0, %s25
      %s28 = sphi 0, %s27
      %s42 = sphi 0, %s28
      %s46 = sphi 0, %s46
      %s48 = sphi 0, %s46
      %s49 = sphi 0, %s48
      %s63 = sphi 0, %s49
      %s69 = sphi 0, %s71
      %s72 = sphi 0, %s69
      %s73 = sphi 0, %s72
      %s89 = sphi 0, %s73
      %s95 = sphi 0, %s97
      %s98 = sphi 0, %s95
      %s99 = sphi 0, %s98
      %s115 = sphi 0, %s99
    $region4: #{tpu_custom_call.1} parent=1 // loop_header_branch
      %20 = sbr.rel (%p18) target = $region8
    $region5: #{tpu_custom_call.1} parent=1 // loop_body
      %s22 = ssub.s32 %s17, 1
      %s23 = ssub.s32 %s17, 2
      %s24 = sadd.s32 %s17, 1
      %s26 = sadd.s32 %s25, 1
      %p29 = scmp.eq.s32.totalorder %s17, 1
      %p30 = scmp.ne.s32.totalorder %s25, %s27
      %p31 = scmp.eq.s32.totalorder %s17, 0
      %p32 = por %p30, %p31
      %p33 = scmp.ne.s32.totalorder %s25, %s27
      %p34 = scmp.eq.s32.totalorder %s22, 1
      %p35 = por %p33, %p34
      %p36 = scmp.ne.s32.totalorder %s27, %s28
      %p37 = scmp.eq.s32.totalorder %s22, 0
      %p38 = por %p36, %p37
      %p39 = scmp.ne.s32.totalorder %s27, %s28
      %p40 = scmp.eq.s32.totalorder %s23, 1
      %p41 = por %p39, %p40
      %p43 = scmp.ne.s32.totalorder %s28, %s42
      %p44 = scmp.eq.s32.totalorder %s23, 0
      %p45 = por %p43, %p44
      %s47 = sadd.s32 %s46, 1
      %p50 = scmp.eq.s32.totalorder %s17, 1
      %p51 = scmp.ne.s32.totalorder %s46, %s48
      %p52 = scmp.eq.s32.totalorder %s17, 0
      %p53 = por %p51, %p52
      %p54 = scmp.ne.s32.totalorder %s46, %s48
      %p55 = scmp.eq.s32.totalorder %s22, 1
      %p56 = por %p54, %p55
      %p57 = scmp.ne.s32.totalorder %s48, %s49
      %p58 = scmp.eq.s32.totalorder %s22, 0
      %p59 = por %p57, %p58
      %p60 = scmp.ne.s32.totalorder %s48, %s49
      %p61 = scmp.eq.s32.totalorder %s23, 1
      %p62 = por %p60, %p61
      %p64 = scmp.ne.s32.totalorder %s49, %s63
      %p65 = scmp.eq.s32.totalorder %s23, 0
      %p66 = por %p64, %p65
      %s67 = ssub.s32 %s17, %s24
      %p68 = scmp.eq.s32.totalorder %s67, 0
      %s70 = sadd.s32 %s69, 1
      %s71 = scalar_select %p68, %s69, %s70
      %p74 = pneg %p68
      %p75 = scmp.eq.s32.totalorder %s17, 1
      %p76 = por %p74, %p75
      %p77 = scmp.ne.s32.totalorder %s69, %s72
      %p78 = scmp.eq.s32.totalorder %s17, 0
      %p79 = por %p77, %p78
      %p80 = scmp.ne.s32.totalorder %s69, %s72
      %p81 = scmp.eq.s32.totalorder %s22, 1
      %p82 = por %p80, %p81
      %p83 = scmp.ne.s32.totalorder %s72, %s73
      %p84 = scmp.eq.s32.totalorder %s22, 0
      %p85 = por %p83, %p84
      %p86 = scmp.ne.s32.totalorder %s72, %s73
      %p87 = scmp.eq.s32.totalorder %s23, 1
      %p88 = por %p86, %p87
      %p90 = scmp.ne.s32.totalorder %s73, %s89
      %p91 = scmp.eq.s32.totalorder %s23, 0
      %p92 = por %p90, %p91
      %s93 = ssub.s32 %s17, %s24
      %p94 = scmp.eq.s32.totalorder %s93, 0
      %s96 = sadd.s32 %s95, 1
      %s97 = scalar_select %p94, %s95, %s96
      %p100 = pneg %p94
      %p101 = scmp.eq.s32.totalorder %s17, 1
      %p102 = por %p100, %p101
      %p103 = scmp.ne.s32.totalorder %s95, %s98
      %p104 = scmp.eq.s32.totalorder %s17, 0
      %p105 = por %p103, %p104
      %p106 = scmp.ne.s32.totalorder %s95, %s98
      %p107 = scmp.eq.s32.totalorder %s22, 1
      %p108 = por %p106, %p107
      %p109 = scmp.ne.s32.totalorder %s98, %s99
      %p110 = scmp.eq.s32.totalorder %s22, 0
      %p111 = por %p109, %p110
      %p112 = scmp.ne.s32.totalorder %s98, %s99
      %p113 = scmp.eq.s32.totalorder %s23, 1
      %p114 = por %p112, %p113
      %p116 = scmp.ne.s32.totalorder %s99, %s115
      %p117 = scmp.eq.s32.totalorder %s23, 0
      %p118 = por %p116, %p117
      %p119 = scmp.le.s32.totalorder 1, %s17
      %p120 = scmp.lt.s32.totalorder %s17, 3
      %p121 = pnand %p119, %p120
      %p122 = pneg %p121
      // Predicated region
      $region9: #{tpu_custom_call.1} parent=5 // pred_check
        _
      $region10: #{tpu_custom_call.1} parent=5 // pred_check_branch
        %124 = sbr.rel (%p121) target = $region12
      $region11: #{tpu_custom_call.1} parent=5 // pred_region
        %s125 = ssub.s32 %s17, 1
        // Predicated region
        $region13: #{tpu_custom_call.1} parent=11 // pred_check
          %p126 = pneg %p38
        $region14: #{tpu_custom_call.1} parent=11 // pred_check_branch
          %128 = sbr.rel (%p126) target = $region16
        $region15: #{tpu_custom_call.1} parent=11 // pred_region
          _
        $region16: #{tpu_custom_call.1} parent=11 // pred_fallthru
          _
        // Predicated region
        $region17: #{tpu_custom_call.1} parent=11 // pred_check
          %p129 = pneg %p59
        $region18: #{tpu_custom_call.1} parent=11 // pred_check_branch
          %131 = sbr.rel (%p129) target = $region20
        $region19: #{tpu_custom_call.1} parent=11 // pred_region
          _
        $region20: #{tpu_custom_call.1} parent=11 // pred_fallthru
          _
      $region12: #{tpu_custom_call.1} parent=5 // pred_fallthru
        _
      %p132 = scmp.lt.s32.totalorder %s17, 2
      // Predicated region
      $region21: #{tpu_custom_call.1} parent=5 // pred_check
        %p133 = pneg %p132
      $region22: #{tpu_custom_call.1} parent=5 // pred_check_branch
        %135 = sbr.rel (%p133) target = $region24
      $region23: #{tpu_custom_call.1} parent=5 // pred_region
        // Predicated region
        $region25: #{tpu_custom_call.1} parent=23 // pred_check
          %p136 = pneg %p79
        $region26: #{tpu_custom_call.1} parent=23 // pred_check_branch
          %138 = sbr.rel (%p136) target = $region28
        $region27: #{tpu_custom_call.1} parent=23 // pred_region
          %s139 = sand.u32 %s69, 1
          %s140 = scalar_lea.sflag [#allocation5], %s139
          %s141 = sand.u32 %s69, 1
          %s142 = smul.addr %s141, 8
          %s143 = scalar_lea.vmem [#allocation4], %s142
          %s145 = ssub.s32 128, 128
          %146 = vsyncadd %s140, %s145
          %s147 = smul.addr %s17, 128
          %s148 = scalar_lea.hbm %s2, %s147
          %s150 = sshll.u32 %s143, 4
          %s151 = int_to_ptr.vmem [resolvable:$true] %s150
          %153 = dma.hbm_to_vmem [thread:$0]  %s148, 128, %s151, %s140
        $region28: #{tpu_custom_call.1} parent=23 // pred_fallthru
          _
      $region24: #{tpu_custom_call.1} parent=5 // pred_fallthru
        _
      %p154 = scmp.le.s32.totalorder 1, %s17
      %p155 = scmp.lt.s32.totalorder %s17, 3
      %p156 = pnand %p154, %p155
      %p157 = pneg %p156
      // Predicated region
      $region29: #{tpu_custom_call.1} parent=5 // pred_check
        _
      $region30: #{tpu_custom_call.1} parent=5 // pred_check_branch
        %159 = sbr.rel (%p156) target = $region32
      $region31: #{tpu_custom_call.1} parent=5 // pred_region
        %s160 = ssub.s32 %s17, 1
        %s161 = sand.u32 %s72, 1
        %s162 = scalar_lea.sflag [#allocation5], %s161
        %s163 = sand.u32 %s72, 1
        %s164 = smul.addr %s163, 8
        %s165 = scalar_lea.vmem [#allocation4], %s164
        // Predicated region
        $region33: #{tpu_custom_call.1} parent=31 // pred_check
          %p166 = pneg %p85
        $region34: #{tpu_custom_call.1} parent=31 // pred_check_branch
          %168 = sbr.rel (%p166) target = $region36
        $region35: #{tpu_custom_call.1} parent=31 // pred_region
          %169 = dma.done %s162, 128
        $region36: #{tpu_custom_call.1} parent=31 // pred_fallthru
          _
        %p170 = pneg %p38
        %p171 = pneg %p35
        %p172 = pneg %p59
        %p173 = pneg %p56
        %s174 = sand.u32 %s72, 1
        %s175 = scalar_lea.sflag [#allocation5], %s174
        %s176 = sand.u32 %s72, 1
        %s177 = smul.addr %s176, 8
        %s178 = scalar_lea.vmem [#allocation4], %s177
        %p179 = pneg %p85
        %p180 = pneg %p82
        %p181 = pneg %p111
        %p182 = pneg %p108
        %s183 = sand.u32 %s98, 1
        %s184 = scalar_lea.sflag [#allocation6], %s183
        %s185 = sand.u32 %s98, 1
        %s186 = smul.addr %s185, 8
        %s187 = scalar_lea.vmem [#allocation7], %s186
        %s188 = sld [smem:[#allocation2]]
        %s189 = sld [smem:[#allocation3]]
        %v190 = vld [vmem:[%s165] sm:$0xff]
        %vm191 = vcmp.ge.f32.partialorder %v190, 0.0
        %v192 = vstv %s188
        %v193 = vmul.f32 %v192, %v190
        %v194 = vstv %s189
        %v195 = vmul.f32 %v194, %v190
        %v196 = vmul.f32 %v195, 1.442695
        %v197 = vpow.pop %v196
        %v198 = vmul.f32 %v193, %v197
        %v199 = vsel %vm191, %v190, %v198
        %vm200 = vcmp.ne.f32.partialorder %v199, %v199
        %v201 = vsel %vm200, 0.0, %v199
        %vm202 = vcmp.eq.f32.partialorder %v201, inf
        %v203 = vsel %vm202, 3.4028235e+38, %v201
        %vm204 = vcmp.eq.f32.partialorder %v203, -inf
        %v205 = vsel %vm204, -3.4028235e+38, %v203
        %206 = vst [vmem:[%s187] sm:$0xff] %v205
        %s207 = sand.u32 %s98, 1
        %s208 = scalar_lea.sflag [#allocation6], %s207
        %s209 = sand.u32 %s98, 1
        %s210 = smul.addr %s209, 8
        %s211 = scalar_lea.vmem [#allocation7], %s210
        // Predicated region
        $region37: #{tpu_custom_call.1} parent=31 // pred_check
          %p212 = pneg %p108
        $region38: #{tpu_custom_call.1} parent=31 // pred_check_branch
          %214 = sbr.rel (%p212) target = $region40
        $region39: #{tpu_custom_call.1} parent=31 // pred_region
          %s216 = ssub.s32 128, 128
          %217 = vsyncadd %s208, %s216
          %s218 = smul.addr %s22, 128
          %s219 = scalar_lea.hbm %s3, %s218
          %s221 = sshll.u32 %s211, 4
          %s222 = int_to_ptr.vmem [resolvable:$true] %s221
          %224 = dma.vmem_to_hbm [thread:$0]  %s222, 128, %s219, %s208
        $region40: #{tpu_custom_call.1} parent=31 // pred_fallthru
          _
      $region32: #{tpu_custom_call.1} parent=5 // pred_fallthru
        _
      %p225 = scmp.le.s32.totalorder 2, %s17
      // Predicated region
      $region41: #{tpu_custom_call.1} parent=5 // pred_check
        %p226 = pneg %p225
      $region42: #{tpu_custom_call.1} parent=5 // pred_check_branch
        %228 = sbr.rel (%p226) target = $region44
      $region43: #{tpu_custom_call.1} parent=5 // pred_region
        %s229 = ssub.s32 %s17, 2
        // Predicated region
        $region45: #{tpu_custom_call.1} parent=43 // pred_check
          %p230 = pneg %p114
        $region46: #{tpu_custom_call.1} parent=43 // pred_check_branch
          %232 = sbr.rel (%p230) target = $region48
        $region47: #{tpu_custom_call.1} parent=43 // pred_region
          %s233 = sand.u32 %s99, 1
          %s234 = scalar_lea.sflag [#allocation6], %s233
          %s235 = sand.u32 %s99, 1
          %s236 = smul.addr %s235, 8
          %s237 = scalar_lea.vmem [#allocation7], %s236
          %238 = dma.done %s234, 128
        $region48: #{tpu_custom_call.1} parent=43 // pred_fallthru
          _
      $region44: #{tpu_custom_call.1} parent=5 // pred_fallthru
        _
    $region6: #{tpu_custom_call.1} parent=1 // loop_footer
      %s21 = sadd.s32 1, %s17
    $region7: #{tpu_custom_call.1} parent=1 // loop_footer_branch
      %16 = sbr.rel target = $region3
    $region8: #{tpu_custom_call.1} parent=1 // loop_exit
      _
    %239 = vsyncpa [#allocation5], 1
    %s240 = scalar_lea.sflag [#allocation5], 1
    %241 = vsyncpa %s240, 1
    %242 = vsyncpa [#allocation6], 1
    %s243 = scalar_lea.sflag [#allocation6], 1
    %244 = vsyncpa %s243, 1

</llo_original>
